<compile_context>
chip_gen: v5e
topology: v5e:2x2
jax: 0.10.0
libtpu: 0.0.40
codegen_flags: <defaults>
</compile_context>

<pallas_src>
import functools

import jax
import jax.numpy as jnp
from jax.experimental import pallas as pl
from jax.experimental.pallas import tpu as pltpu


def _amsoftmax_kernel(sm_ref, x_ref, tgt_ref, out_ref, m_sc, l_sc, t_sc,
                      *, B, C, Bt, Ct):
    b = pl.program_id(0)            # batch-tile index  ("parallel")
    c = pl.program_id(1)            # class-tile index  ("arbitrary", reduction)
    nc = pl.num_programs(1)

    scale = sm_ref[0]               # SMEM scalars (scalar prefetch)
    margin = sm_ref[1]

    @pl.when(c == 0)
    def _init():
        m_sc[...] = jnp.full_like(m_sc, -jnp.inf)   # running max
        l_sc[...] = jnp.zeros_like(l_sc)            # running sum of exp
        t_sc[...] = jnp.zeros_like(t_sc)            # target logit

    x = x_ref[...].astype(jnp.float32)              # (Bt, Ct), upcast in-register
    tgt = tgt_ref[...]                              # (Bt, 1) int32

    col = jax.lax.broadcasted_iota(jnp.int32, (Bt, Ct), 1) + c * Ct
    row = jax.lax.broadcasted_iota(jnp.int32, (Bt, 1), 0) + b * Bt
    valid_c = col < C                               # class-axis tail mask
    valid_r = row < B                               # batch-axis tail mask

    is_tgt = col == tgt
    # Fused margin subtraction: single select, no one-hot tensor.
    logits = jnp.where(is_tgt, x - margin, x) * scale
    logits = jnp.where(valid_c, logits, -jnp.inf)   # padded classes -> -inf
    logits = jnp.where(valid_r, logits, 0.0)        # padded rows -> benign finite

    # Accumulate the target-class logit inline (it appears in exactly one tile).
    t_sc[...] += jnp.sum(jnp.where(is_tgt, logits, 0.0), axis=-1, keepdims=True)

    # Online (streaming) logsumexp over the class axis.
    m_prev = m_sc[...]
    m_new = jnp.maximum(m_prev, jnp.max(logits, axis=-1, keepdims=True))
    alpha = jnp.exp(m_prev - m_new)
    p = jnp.exp(logits - m_new)
    l_sc[...] = alpha * l_sc[...] + jnp.sum(p, axis=-1, keepdims=True)
    m_sc[...] = m_new

    @pl.when(c == nc - 1)
    def _finalize():
        lse = m_sc[...] + jnp.log(l_sc[...])                 # (Bt, 1)
        nll = jnp.where(valid_r, lse - t_sc[...], 0.0)       # -logpt, padded rows = 0
        # Lane-dense (1, Bt, 128) store: per-row NLL in lane 0, zeros elsewhere.
        lane = jax.lax.broadcasted_iota(jnp.int32, (1, Bt, 128), 2)
        out_ref[...] = jnp.where(lane == 0, nll.reshape(1, Bt, 1), 0.0)


def amsoftmax_loss(cos_theta, target, scale=5.0, margin=0.35, bt=8, ct=128):
    """cos_theta: (B, C) float (any float dtype); target: (B,) int. Scalar f32 loss."""
    B, C = cos_theta.shape
    nb = pl.cdiv(B, bt)
    nc = pl.cdiv(C, ct)
    tgt2d = target.reshape(B, 1).astype(jnp.int32)
    sm = jnp.array([scale, margin], dtype=jnp.float32)      # SMEM scalar prefetch

    kernel = functools.partial(_amsoftmax_kernel, B=B, C=C, Bt=bt, Ct=ct)

    partials = pl.pallas_call(
        kernel,
        out_shape=jax.ShapeDtypeStruct((nb, bt, 128), jnp.float32),
        grid_spec=pltpu.PrefetchScalarGridSpec(
            num_scalar_prefetch=1,
            grid=(nb, nc),
            in_specs=[
                pl.BlockSpec((bt, ct), lambda b, c, sm: (b, c)),   # cos_theta tile
                pl.BlockSpec((bt, 1), lambda b, c, sm: (b, 0)),    # targets per batch tile
            ],
            out_specs=pl.BlockSpec((1, bt, 128), lambda b, c, sm: (b, 0, 0)),
            scratch_shapes=[
                pltpu.VMEM((bt, 1), jnp.float32),   # running max
                pltpu.VMEM((bt, 1), jnp.float32),   # running sum
                pltpu.VMEM((bt, 1), jnp.float32),   # target logit
            ],
        ),
        compiler_params=pltpu.CompilerParams(
            dimension_semantics=("parallel", "arbitrary")),
    )(sm, cos_theta, tgt2d)

    return jnp.sum(partials) / B


def _amsoftmax_ref(cos_theta, target, scale=5.0, margin=0.35):
    B, C = cos_theta.shape
    x = cos_theta.astype(jnp.float32)
    onehot = jax.nn.one_hot(target, C, dtype=jnp.float32)
    logits = (x - margin * onehot) * scale
    logp = jax.nn.log_softmax(logits, axis=-1)
    logpt = jnp.take_along_axis(logp, target.reshape(-1, 1), axis=1).reshape(-1)
    return jnp.mean(-logpt)


if __name__ == "__main__":
    key = jax.random.PRNGKey(0)
    kx, kt = jax.random.split(key)

    # Small synthetic shapes, deliberately NOT multiples of the tile sizes
    # so both tail-masking paths (batch and class) are exercised.
    B, C = 12, 300
    x = jnp.tanh(jax.random.normal(kx, (B, C), dtype=jnp.float32))   # cos_theta in [-1, 1]
    target = jax.random.randint(kt, (B,), 0, C, dtype=jnp.int32)

    loss = amsoftmax_loss(x, target, scale=5.0, margin=0.35, bt=8, ct=128)
    jax.block_until_ready(loss)

    ref = _amsoftmax_ref(x, target, scale=5.0, margin=0.35)
    assert jnp.allclose(loss, ref, atol=1e-5, rtol=1e-5), (loss, ref)

    print("KERNEL_OK")
</pallas_src>

<mosaic_0001>
module attributes {stable_mosaic.version = 11 : i64} {
  func.func @_amsoftmax_kernel(%arg0: i32, %arg1: i32, %arg2: memref<2xf32, #tpu.memory_space<smem>>, %arg3: memref<8x128xf32, #tpu.memory_space<vmem>>, %arg4: memref<8x1xi32, #tpu.memory_space<vmem>>, %arg5: memref<1x8x128xf32, #tpu.memory_space<vmem>>, %arg6: memref<8x1xf32, #tpu.memory_space<vmem>>, %arg7: memref<8x1xf32, #tpu.memory_space<vmem>>, %arg8: memref<8x1xf32, #tpu.memory_space<vmem>>) attributes {dimension_semantics = [#tpu.dimension_semantics<parallel>, #tpu.dimension_semantics<arbitrary>], iteration_bounds = array<i64: 2, 3>, scalar_prefetch = 1 : i64, scratch_operands = 3 : i64, tpu.core_type = #tpu.core_type<tc>, window_params = [{transform_indices = @transform_0, window_bounds = array<i64: 8, 128>}, {transform_indices = @transform_1, window_bounds = array<i64: 8, 1>}, {transform_indices = @transform_2, window_bounds = array<i64: 1, 8, 128>}]} {
    %c0 = arith.constant 0 : index
    %0 = memref.load %arg2[%c0] : memref<2xf32, #tpu.memory_space<smem>>
    %c1 = arith.constant 1 : index
    %1 = memref.load %arg2[%c1] : memref<2xf32, #tpu.memory_space<smem>>
    %c0_i32 = arith.constant 0 : i32
    %2 = arith.cmpi eq, %arg1, %c0_i32 : i32
    %3 = arith.extui %2 : i1 to i32
    %c0_i32_0 = arith.constant 0 : i32
    %4 = arith.cmpi ne, %3, %c0_i32_0 : i32
    scf.if %4 {
      %cst_23 = arith.constant 0xFF800000 : f32
      %58 = vector.broadcast %cst_23 : f32 to vector<8x1xf32>
      %c0_24 = arith.constant 0 : index
      %c0_25 = arith.constant 0 : index
      %59 = vector.load %arg6[%c0_24, %c0_25] : memref<8x1xf32, #tpu.memory_space<vmem>>, vector<8x1xf32>
      tpu.vector_store %arg6[%c0_24, %c0_25], %58 {strides = array<i32>} : memref<8x1xf32, #tpu.memory_space<vmem>>, vector<8x1xf32>,
      %cst_26 = arith.constant 0.000000e+00 : f32
      %60 = vector.broadcast %cst_26 : f32 to vector<8x1xf32>
      %c0_27 = arith.constant 0 : index
      %c0_28 = arith.constant 0 : index
      %61 = vector.load %arg7[%c0_27, %c0_28] : memref<8x1xf32, #tpu.memory_space<vmem>>, vector<8x1xf32>
      tpu.vector_store %arg7[%c0_27, %c0_28], %60 {strides = array<i32>} : memref<8x1xf32, #tpu.memory_space<vmem>>, vector<8x1xf32>,
      %cst_29 = arith.constant 0.000000e+00 : f32
      %62 = vector.broadcast %cst_29 : f32 to vector<8x1xf32>
      %c0_30 = arith.constant 0 : index
      %c0_31 = arith.constant 0 : index
      %63 = vector.load %arg8[%c0_30, %c0_31] : memref<8x1xf32, #tpu.memory_space<vmem>>, vector<8x1xf32>
      tpu.vector_store %arg8[%c0_30, %c0_31], %62 {strides = array<i32>} : memref<8x1xf32, #tpu.memory_space<vmem>>, vector<8x1xf32>,
    } else {
    }
    %c0_1 = arith.constant 0 : index
    %c0_2 = arith.constant 0 : index
    %5 = vector.load %arg3[%c0_1, %c0_2] : memref<8x128xf32, #tpu.memory_space<vmem>>, vector<8x128xf32>
    %c0_3 = arith.constant 0 : index
    %c0_4 = arith.constant 0 : index
    %6 = vector.load %arg4[%c0_3, %c0_4] : memref<8x1xi32, #tpu.memory_space<vmem>>, vector<8x1xi32>
    %7 = tpu.iota {dimensions = array<i32: 1>} : vector<8x128xi32>
    %c128_i32 = arith.constant 128 : i32
    %8 = arith.muli %arg1, %c128_i32 : i32
    %9 = vector.broadcast %8 : i32 to vector<8x128xi32>
    %10 = arith.addi %7, %9 : vector<8x128xi32>
    %11 = tpu.iota {dimensions = array<i32: 0>} : vector<8x1xi32>
    %c8_i32 = arith.constant 8 : i32
    %12 = arith.muli %arg0, %c8_i32 : i32
    %13 = vector.broadcast %12 : i32 to vector<8x1xi32>
    %14 = arith.addi %11, %13 : vector<8x1xi32>
    %c300_i32 = arith.constant 300 : i32
    %15 = vector.broadcast %c300_i32 : i32 to vector<8x128xi32>
    %16 = arith.cmpi slt, %10, %15 : vector<8x128xi32>
    %c12_i32 = arith.constant 12 : i32
    %17 = vector.broadcast %c12_i32 : i32 to vector<8x1xi32>
    %18 = arith.cmpi slt, %14, %17 : vector<8x1xi32>
    %19 = vector.broadcast %6 : vector<8x1xi32> to vector<8x128xi32>
    %20 = arith.cmpi eq, %10, %19 : vector<8x128xi32>
    %21 = vector.broadcast %1 : f32 to vector<8x128xf32>
    %22 = arith.subf %5, %21 : vector<8x128xf32>
    %23 = arith.select %20, %22, %5 : vector<8x128xi1>, vector<8x128xf32>
    %24 = vector.broadcast %0 : f32 to vector<8x128xf32>
    %25 = arith.mulf %23, %24 : vector<8x128xf32>
    %cst = arith.constant 0xFF800000 : f32
    %26 = vector.broadcast %cst : f32 to vector<8x128xf32>
    %27 = arith.select %16, %25, %26 : vector<8x128xi1>, vector<8x128xf32>
    %cst_5 = arith.constant 0.000000e+00 : f32
    %28 = vector.shape_cast %18 : vector<8x1xi1> to vector<8x1xi1>
    %29 = vector.broadcast %28 : vector<8x1xi1> to vector<8x128xi1>
    %30 = vector.broadcast %cst_5 : f32 to vector<8x128xf32>
    %31 = arith.select %29, %27, %30 : vector<8x128xi1>, vector<8x128xf32>
    %c0_6 = arith.constant 0 : index
    %c0_7 = arith.constant 0 : index
    %32 = vector.load %arg8[%c0_6, %c0_7] : memref<8x1xf32, #tpu.memory_space<vmem>>, vector<8x1xf32>
    %cst_8 = arith.constant 0.000000e+00 : f32
    %33 = vector.broadcast %cst_8 : f32 to vector<8x128xf32>
    %34 = arith.select %20, %31, %33 : vector<8x128xi1>, vector<8x128xf32>
    %cst_9 = arith.constant dense<0.000000e+00> : vector<8xf32>
    %35 = vector.multi_reduction <add>, %34, %cst_9 [1] : vector<8x128xf32> to vector<8xf32>
    %36 = vector.shape_cast %35 : vector<8xf32> to vector<8x1xf32>
    %37 = arith.addf %32, %36 : vector<8x1xf32>
    %c0_10 = arith.constant 0 : index
    %c0_11 = arith.constant 0 : index
    %38 = vector.load %arg8[%c0_10, %c0_11] : memref<8x1xf32, #tpu.memory_space<vmem>>, vector<8x1xf32>
    tpu.vector_store %arg8[%c0_10, %c0_11], %37 {strides = array<i32>} : memref<8x1xf32, #tpu.memory_space<vmem>>, vector<8x1xf32>,
    %c0_12 = arith.constant 0 : index
    %c0_13 = arith.constant 0 : index
    %39 = vector.load %arg6[%c0_12, %c0_13] : memref<8x1xf32, #tpu.memory_space<vmem>>, vector<8x1xf32>
    %cst_14 = arith.constant dense<0xFF800000> : vector<8xf32>
    %40 = vector.multi_reduction <maximumf>, %31, %cst_14 [1] : vector<8x128xf32> to vector<8xf32>
    %41 = vector.shape_cast %40 : vector<8xf32> to vector<8x1xf32>
    %42 = arith.maximumf %39, %41 : vector<8x1xf32>
    %43 = arith.subf %39, %42 : vector<8x1xf32>
    %44 = math.exp %43 : vector<8x1xf32>
    %45 = vector.broadcast %42 : vector<8x1xf32> to vector<8x128xf32>
    %46 = arith.subf %31, %45 : vector<8x128xf32>
    %47 = math.exp %46 : vector<8x128xf32>
    %c0_15 = arith.constant 0 : index
    %c0_16 = arith.constant 0 : index
    %48 = vector.load %arg7[%c0_15, %c0_16] : memref<8x1xf32, #tpu.memory_space<vmem>>, vector<8x1xf32>
    %49 = arith.mulf %44, %48 : vector<8x1xf32>
    %cst_17 = arith.constant dense<0.000000e+00> : vector<8xf32>
    %50 = vector.multi_reduction <add>, %47, %cst_17 [1] : vector<8x128xf32> to vector<8xf32>
    %51 = vector.shape_cast %50 : vector<8xf32> to vector<8x1xf32>
    %52 = arith.addf %49, %51 : vector<8x1xf32>
    %c0_18 = arith.constant 0 : index
    %c0_19 = arith.constant 0 : index
    %53 = vector.load %arg7[%c0_18, %c0_19] : memref<8x1xf32, #tpu.memory_space<vmem>>, vector<8x1xf32>
    tpu.vector_store %arg7[%c0_18, %c0_19], %52 {strides = array<i32>} : memref<8x1xf32, #tpu.memory_space<vmem>>, vector<8x1xf32>,
    %c0_20 = arith.constant 0 : index
    %c0_21 = arith.constant 0 : index
    %54 = vector.load %arg6[%c0_20, %c0_21] : memref<8x1xf32, #tpu.memory_space<vmem>>, vector<8x1xf32>
    tpu.vector_store %arg6[%c0_20, %c0_21], %42 {strides = array<i32>} : memref<8x1xf32, #tpu.memory_space<vmem>>, vector<8x1xf32>,
    %c2_i32 = arith.constant 2 : i32
    %55 = arith.cmpi eq, %arg1, %c2_i32 : i32
    %56 = arith.extui %55 : i1 to i32
    %c0_i32_22 = arith.constant 0 : i32
    %57 = arith.cmpi ne, %56, %c0_i32_22 : i32
    scf.if %57 {
      %c0_23 = arith.constant 0 : index
      %c0_24 = arith.constant 0 : index
      %58 = vector.load %arg6[%c0_23, %c0_24] : memref<8x1xf32, #tpu.memory_space<vmem>>, vector<8x1xf32>
      %c0_25 = arith.constant 0 : index
      %c0_26 = arith.constant 0 : index
      %59 = vector.load %arg7[%c0_25, %c0_26] : memref<8x1xf32, #tpu.memory_space<vmem>>, vector<8x1xf32>
      %60 = math.log %59 : vector<8x1xf32>
      %61 = arith.addf %58, %60 : vector<8x1xf32>
      %c0_27 = arith.constant 0 : index
      %c0_28 = arith.constant 0 : index
      %62 = vector.load %arg8[%c0_27, %c0_28] : memref<8x1xf32, #tpu.memory_space<vmem>>, vector<8x1xf32>
      %63 = arith.subf %61, %62 : vector<8x1xf32>
      %cst_29 = arith.constant 0.000000e+00 : f32
      %64 = vector.broadcast %cst_29 : f32 to vector<8x1xf32>
      %65 = arith.select %18, %63, %64 : vector<8x1xi1>, vector<8x1xf32>
      %66 = tpu.iota {dimensions = array<i32: 2>} : vector<1x8x128xi32>
      %c0_i32_30 = arith.constant 0 : i32
      %67 = vector.broadcast %c0_i32_30 : i32 to vector<1x8x128xi32>
      %68 = arith.cmpi eq, %66, %67 : vector<1x8x128xi32>
      %69 = vector.shape_cast %65 : vector<8x1xf32> to vector<1x8x1xf32>
      %cst_31 = arith.constant 0.000000e+00 : f32
      %70 = vector.shape_cast %69 : vector<1x8x1xf32> to vector<1x8x1xf32>
      %71 = vector.broadcast %70 : vector<1x8x1xf32> to vector<1x8x128xf32>
      %72 = vector.broadcast %cst_31 : f32 to vector<1x8x128xf32>
      %73 = arith.select %68, %71, %72 : vector<1x8x128xi1>, vector<1x8x128xf32>
      %c0_32 = arith.constant 0 : index
      %c0_33 = arith.constant 0 : index
      %c0_34 = arith.constant 0 : index
      %74 = vector.load %arg5[%c0_32, %c0_33, %c0_34] : memref<1x8x128xf32, #tpu.memory_space<vmem>>, vector<1x8x128xf32>
      tpu.vector_store %arg5[%c0_32, %c0_33, %c0_34], %73 {strides = array<i32>} : memref<1x8x128xf32, #tpu.memory_space<vmem>>, vector<1x8x128xf32>,
    } else {
    }
    return
  }
  func.func @transform_0(%arg0: i32, %arg1: i32, %arg2: memref<2xf32, #tpu.memory_space<smem>>) -> (i32, i32) {
    %c0_i32 = arith.constant 0 : i32
    return %arg0, %arg1 : i32, i32
  }
  func.func @transform_1(%arg0: i32, %arg1: i32, %arg2: memref<2xf32, #tpu.memory_space<smem>>) -> (i32, i32) {
    %c0_i32 = arith.constant 0 : i32
    %c0_i32_0 = arith.constant 0 : i32
    return %arg0, %c0_i32 : i32, i32
  }
  func.func @transform_2(%arg0: i32, %arg1: i32, %arg2: memref<2xf32, #tpu.memory_space<smem>>) -> (i32, i32, i32) {
    %c0_i32 = arith.constant 0 : i32
    %c0_i32_0 = arith.constant 0 : i32
    %c0_i32_1 = arith.constant 0 : i32
    return %arg0, %c0_i32, %c0_i32_0 : i32, i32, i32
  }
}

</mosaic_0001>

<llo_original>
// kernel: tpu_custom_call.1
$region0: #{tpu_custom_call.1}
  #allocation0 [shape = 'u32[]', space=smem, size = 0x4, offset = 0x4, fixed_abs, tag = 'smem constant byte address 0x4 - core index']
  #allocation1 [shape = 'u32[72,128]{1,0:T(1,128)}', space=vmem, size = 0x9000, scoped, tag = 'internal scratch']
  #allocation2 [shape = 'f32[8,1]{1,0:T(8,128)}', space=vmem, size = 0x1000, scoped, tag = 'scratch operand']
  #allocation3 [shape = 'f32[8,1]{1,0:T(8,128)}', space=vmem, size = 0x1000, scoped, tag = 'scratch operand']
  #allocation4 [shape = 'f32[8,1]{1,0:T(8,128)}', space=vmem, size = 0x1000, scoped, tag = 'scratch operand']
  #allocation5 [shape = 's32[1]{0}', space=sflag, size = 0x4, scoped, tag = 'scoped memory for tpu_custom_call.1']
  #allocation6 [shape = 'u8[512]{0}', space=smem, size = 0x200, scoped, tag = 'prefetched SMEM operand 0']
  %s0 = inlined_call_operand.vmem [shape: f32[2], index: 0, kind: input, shape index: {}]
  %s1 = inlined_call_operand.hbm [shape: f32[12,300], index: 1, kind: input, shape index: {}]
  %s2 = inlined_call_operand.vmem [shape: s32[12,1], index: 2, kind: input, shape index: {}]
  %s3 = inlined_call_operand.hbm [shape: f32[2,8,128], index: 3, kind: output, shape index: {}]
  %s4 = sld [smem:[#allocation0]]
  $region53: #{tpu_custom_call.1} parent=0
    _
  %s6 = ssub.s32 1, %s4
  %s7 = scalar_select 0, %s6, %s4
  %s9 = sshll.u32 %s0, 4
  %s10 = int_to_ptr.vmem [resolvable:$true] %s9
  %12 = dma.vmem_to_smem %s10, 16, [#allocation6], [#allocation5]
  %14 = dma.done [#allocation5], 16
  %15 = sfence
  $region1: #{tpu_custom_call.1} parent=0
    #allocation7 [shape = 'u8[8192]{0}', space=vmem, size = 0x2000, scoped, tag = 'input window, operand 1']
    #allocation8 [shape = 's32[2]{0}', space=sflag, size = 0x8, scoped, tag = 'scoped memory for tpu_custom_call.1']
    #allocation9 [shape = 's32[2]{0}', space=sflag, size = 0x8, scoped, tag = 'scoped memory for tpu_custom_call.1']
    #allocation10 [shape = 'u8[8192]{0}', space=vmem, size = 0x2000, scoped, tag = 'output window, operand 0']
    %16 = vsyncpa [#allocation8], 0
    %s17 = scalar_lea.sflag [#allocation8], 1
    %18 = vsyncpa %s17, 0
    %19 = vsyncpa [#allocation9], 0
    %s20 = scalar_lea.sflag [#allocation9], 1
    %21 = vsyncpa %s20, 0
    loop: start=0, step=1, limit=8
    $region2: #{tpu_custom_call.1} parent=1 // loop_pre_header
      _
    $region3: #{tpu_custom_call.1} parent=1 // loop_header
      %s23 = sphi 0, %s27
      %p24 = scmp.ge.s32.totalorder %s23, 8
      %s30 = sphi 0, %s42
      %s31 = sphi 0, %s38
      %s32 = sphi 0, %s30
      %s33 = sphi 0, %s31
      %s34 = sphi 0, %s32
      %s35 = sphi 0, %s33
      %s47 = sphi 0, %s49
      %s50 = sphi 0, %s47
      %s51 = sphi 0, %s50
      %s67 = sphi 0, %s51
      %s73 = sphi 0, %s75
      %s76 = sphi 0, %s73
      %s77 = sphi 0, %s76
      %s93 = sphi 0, %s77
      %s99 = sphi 0, %s101
      %s102 = sphi 0, %s99
      %s103 = sphi 0, %s102
      %s119 = sphi 0, %s103
    $region4: #{tpu_custom_call.1} parent=1 // loop_header_branch
      %26 = sbr.rel (%p24) target = $region8
    $region5: #{tpu_custom_call.1} parent=1 // loop_body
      %s28 = ssub.s32 %s23, 1
      %s29 = ssub.s32 %s23, 2
      %s36 = sadd.s32 1, %s31
      %p37 = scmp.ge.s32.totalorder %s36, 3
      %s38 = scalar_select %p37, 0, %s36
      %s39 = sadd.s32 1, %s30
      %s40 = scalar_select %p37, %s39, %s30
      %p41 = scmp.ge.s32.totalorder %s40, 2
      %s42 = scalar_select %p41, 0, %s40
      %s43 = ssub.s32 %s30, %s42
      %s44 = ssub.s32 %s31, %s38
      %s45 = sor.u32 %s43, %s44
      %p46 = scmp.eq.s32.totalorder %s45, 0
      %s48 = sadd.s32 %s47, 1
      %s49 = scalar_select %p46, %s47, %s48
      %p52 = pneg %p46
      %p53 = scmp.eq.s32.totalorder %s23, 5
      %p54 = por %p52, %p53
      %p55 = scmp.ne.s32.totalorder %s47, %s50
      %p56 = scmp.eq.s32.totalorder %s23, 0
      %p57 = por %p55, %p56
      %p58 = scmp.ne.s32.totalorder %s47, %s50
      %p59 = scmp.eq.s32.totalorder %s28, 5
      %p60 = por %p58, %p59
      %p61 = scmp.ne.s32.totalorder %s50, %s51
      %p62 = scmp.eq.s32.totalorder %s28, 0
      %p63 = por %p61, %p62
      %p64 = scmp.ne.s32.totalorder %s50, %s51
      %p65 = scmp.eq.s32.totalorder %s29, 5
      %p66 = por %p64, %p65
      %p68 = scmp.ne.s32.totalorder %s51, %s67
      %p69 = scmp.eq.s32.totalorder %s29, 0
      %p70 = por %p68, %p69
      %s71 = ssub.s32 %s30, %s42
      %p72 = scmp.eq.s32.totalorder %s71, 0
      %s74 = sadd.s32 %s73, 1
      %s75 = scalar_select %p72, %s73, %s74
      %p78 = pneg %p72
      %p79 = scmp.eq.s32.totalorder %s23, 5
      %p80 = por %p78, %p79
      %p81 = scmp.ne.s32.totalorder %s73, %s76
      %p82 = scmp.eq.s32.totalorder %s23, 0
      %p83 = por %p81, %p82
      %p84 = scmp.ne.s32.totalorder %s73, %s76
      %p85 = scmp.eq.s32.totalorder %s28, 5
      %p86 = por %p84, %p85
      %p87 = scmp.ne.s32.totalorder %s76, %s77
      %p88 = scmp.eq.s32.totalorder %s28, 0
      %p89 = por %p87, %p88
      %p90 = scmp.ne.s32.totalorder %s76, %s77
      %p91 = scmp.eq.s32.totalorder %s29, 5
      %p92 = por %p90, %p91
      %p94 = scmp.ne.s32.totalorder %s77, %s93
      %p95 = scmp.eq.s32.totalorder %s29, 0
      %p96 = por %p94, %p95
      %s97 = ssub.s32 %s30, %s42
      %p98 = scmp.eq.s32.totalorder %s97, 0
      %s100 = sadd.s32 %s99, 1
      %s101 = scalar_select %p98, %s99, %s100
      %p104 = pneg %p98
      %p105 = scmp.eq.s32.totalorder %s23, 5
      %p106 = por %p104, %p105
      %p107 = scmp.ne.s32.totalorder %s99, %s102
      %p108 = scmp.eq.s32.totalorder %s23, 0
      %p109 = por %p107, %p108
      %p110 = scmp.ne.s32.totalorder %s99, %s102
      %p111 = scmp.eq.s32.totalorder %s28, 5
      %p112 = por %p110, %p111
      %p113 = scmp.ne.s32.totalorder %s102, %s103
      %p114 = scmp.eq.s32.totalorder %s28, 0
      %p115 = por %p113, %p114
      %p116 = scmp.ne.s32.totalorder %s102, %s103
      %p117 = scmp.eq.s32.totalorder %s29, 5
      %p118 = por %p116, %p117
      %p120 = scmp.ne.s32.totalorder %s103, %s119
      %p121 = scmp.eq.s32.totalorder %s29, 0
      %p122 = por %p120, %p121
      %p123 = scmp.le.s32.totalorder 1, %s23
      %p124 = scmp.lt.s32.totalorder %s23, 7
      %p125 = pnand %p123, %p124
      %p126 = pneg %p125
      // Predicated region
      $region9: #{tpu_custom_call.1} parent=5 // pred_check
        _
      $region10: #{tpu_custom_call.1} parent=5 // pred_check_branch
        %128 = sbr.rel (%p125) target = $region12
      $region11: #{tpu_custom_call.1} parent=5 // pred_region
        %s129 = ssub.s32 %s23, 1
      $region12: #{tpu_custom_call.1} parent=5 // pred_fallthru
        _
      %p130 = scmp.lt.s32.totalorder %s23, 6
      // Predicated region
      $region13: #{tpu_custom_call.1} parent=5 // pred_check
        %p131 = pneg %p130
      $region14: #{tpu_custom_call.1} parent=5 // pred_check_branch
        %133 = sbr.rel (%p131) target = $region16
      $region15: #{tpu_custom_call.1} parent=5 // pred_region
        // Predicated region
        $region17: #{tpu_custom_call.1} parent=15 // pred_check
          %p134 = pneg %p57
        $region18: #{tpu_custom_call.1} parent=15 // pred_check_branch
          %136 = sbr.rel (%p134) target = $region20
        $region19: #{tpu_custom_call.1} parent=15 // pred_region
          %s137 = sand.u32 %s47, 1
          %s138 = scalar_lea.sflag [#allocation8], %s137
          %s139 = sand.u32 %s47, 1
          %s140 = smul.addr %s139, 8
          %s141 = scalar_lea.vmem [#allocation7], %s140
          %143 = vsyncadd %s138, 0
          %s144 = smul.addr %s30, 3
          %s145 = sadd.s32 %s31, %s144
          %s146 = smul.addr %s145, 8
          %s147 = scalar_lea.hbm %s1, %s146
          %s149 = sshll.u32 %s147, 4
          %s150 = int_to_ptr.hbm [resolvable:$true] %s149
          %s151 = sshll.u32 %s141, 4
          %s152 = int_to_ptr.vmem [resolvable:$true] %s151
          %154 = dma.hbm_to_vmem [thread:$0]  %s150, 128, %s152, %s138
        $region20: #{tpu_custom_call.1} parent=15 // pred_fallthru
          _
        // Predicated region
        $region21: #{tpu_custom_call.1} parent=15 // pred_check
          %p155 = pneg %p83
        $region22: #{tpu_custom_call.1} parent=15 // pred_check_branch
          %157 = sbr.rel (%p155) target = $region24
        $region23: #{tpu_custom_call.1} parent=15 // pred_region
          %p158 = scmp.lt.s32.totalorder %s30, 1
          %s159 = scalar_select %p158, %s30, 1
          %s160 = smul.addr %s159, 8
          %s161 = scalar_lea.vmem %s2, %s160
        $region24: #{tpu_custom_call.1} parent=15 // pred_fallthru
          _
      $region16: #{tpu_custom_call.1} parent=5 // pred_fallthru
        _
      %p162 = scmp.le.s32.totalorder 1, %s23
      %p163 = scmp.lt.s32.totalorder %s23, 7
      %p164 = pnand %p162, %p163
      %p165 = pneg %p164
      // Predicated region
      $region25: #{tpu_custom_call.1} parent=5 // pred_check
        _
      $region26: #{tpu_custom_call.1} parent=5 // pred_check_branch
        %167 = sbr.rel (%p164) target = $region28
      $region27: #{tpu_custom_call.1} parent=5 // pred_region
        %s168 = ssub.s32 %s23, 1
        %s169 = sand.u32 %s50, 1
        %s170 = scalar_lea.sflag [#allocation8], %s169
        %s171 = sand.u32 %s50, 1
        %s172 = smul.addr %s171, 8
        %s173 = scalar_lea.vmem [#allocation7], %s172
        // Predicated region
        $region29: #{tpu_custom_call.1} parent=27 // pred_check
          %p174 = pneg %p63
        $region30: #{tpu_custom_call.1} parent=27 // pred_check_branch
          %176 = sbr.rel (%p174) target = $region32
        $region31: #{tpu_custom_call.1} parent=27 // pred_region
          %178 = dma.done %s170, 128
        $region32: #{tpu_custom_call.1} parent=27 // pred_fallthru
          _
        %s179 = sand.u32 %s50, 1
        %s180 = scalar_lea.sflag [#allocation8], %s179
        %s181 = sand.u32 %s50, 1
        %s182 = smul.addr %s181, 8
        %s183 = scalar_lea.vmem [#allocation7], %s182
        %p184 = pneg %p63
        %p185 = pneg %p60
        %p186 = scmp.lt.s32.totalorder %s32, 1
        %s187 = scalar_select %p186, %s32, 1
        %s188 = smul.addr %s187, 8
        %s189 = scalar_lea.vmem %s2, %s188
        %p190 = pneg %p89
        %p191 = pneg %p86
        %p192 = pneg %p115
        %p193 = pneg %p112
        %s194 = sand.u32 %s102, 1
        %s195 = scalar_lea.sflag [#allocation9], %s194
        %s196 = sand.u32 %s102, 1
        %s197 = smul.addr %s196, 8
        %s198 = scalar_lea.vmem [#allocation10], %s197
        %p199 = scmp.lt.s32.totalorder %s32, 1
        %s200 = scalar_select %p199, %s32, 1
        %s201 = smul.addr %s200, 8
        %s202 = scalar_lea.vmem %s2, %s201
        %s203 = sld [smem:[#allocation6]]
        %s204 = sld [smem:[#allocation6 + $0x1]]
        %p205 = scmp.eq.s32.totalorder %s33, 0
        // Predicated region
        $region33: #{tpu_custom_call.1} parent=27 // pred_check
          %p206 = pneg %p205
        $region34: #{tpu_custom_call.1} parent=27 // pred_check_branch
          %208 = sbr.rel (%p206) target = $region36
        $region35: #{tpu_custom_call.1} parent=27 // pred_region
          %vm209 = vcmask 7168
          %210 = vst.msk [vmem:[#allocation2] sm:$0xff] %vm209, -inf
          %211 = vst.msk [vmem:[#allocation3] sm:$0xff] %vm209, 0.0
          %212 = vst.msk [vmem:[#allocation4] sm:$0xff] %vm209, 0.0
        $region36: #{tpu_custom_call.1} parent=27 // pred_fallthru
          _
        %v213 = vld [vmem:[%s173] sm:$0xff]
        %v214 = vld [vmem:[%s202] sm:$0xff]
        %v215 = vlaneseq
        %v216 = vand.u32 %v215, 127
        %s217 = smul.u32 %s33, 128
        %v218 = vstv %s217
        %v219 = vadd.s32 %v216, %v218
        %v220 = vlaneseq
        %v221 = vshrl.u32 %v220, 7
        %s222 = smul.u32 %s32, 8
        %v223 = vstv %s222
        %v224 = vadd.s32 %v221, %v223
        %vm225 = vcmp.lt.s32.totalorder %v219, 300
        %vm226 = vcmp.lt.s32.totalorder %v224, 12
        %227 = vset.pattern.permute.xlu0 0
        %228 = vperm.xlu0 %227, %v214
        %v229 = vpop.permute.xlu0 %228
        %vm230 = vcmp.eq.s32.totalorder %v219, %v229
        %v231 = vstv %s204
        %v232 = vsub.f32 %v213, %v231
        %v233 = vsel %vm230, %v232, %v213
        %v234 = vstv %s203
        %v235 = vmul.f32 %v233, %v234
        %v236 = vsel %vm225, %v235, -inf
        %v237 = vsel %vm226, 1, 0
        %vm238 = vcmp.eq.s32.totalorder %v237, 1
        %v239 = vsel %vm238, %v236, 0.0
        %v240 = vld [vmem:[#allocation4] sm:$0xff]
        %v241 = vsel %vm230, %v239, 0.0
        %242 = vadd.xlane.f32.xlu0 %v241
        %v243 = vpop.xlane.xlu0 %242
        %v244 = vadd.f32 %v240, %v243
        %vm245 = vcmask 7168
        %246 = vst.msk [vmem:[#allocation4] sm:$0xff] %vm245, %v244
        %v247 = vld [vmem:[#allocation2] sm:$0xff]
        %248 = vmax.xlane.f32.xlu0 %v239
        %v249 = vpop.xlane.xlu0 %248
        %v250 = vmax.f32 %v247, %v249
        %v251 = vsub.f32 %v247, %v250
        %v252 = vmul.f32 %v251, 1.442695
        %v253 = vpow.pop %v252
        %255 = vset.pattern.permute.xlu0 0
        %256 = vperm.xlu0 %255, %v250
        %v257 = vpop.permute.xlu0 %256
        %v259 = vsub.f32 %v239, %v257
        %v260 = vmul.f32 %v259, 1.442695
        %v261 = vpow.pop %v260
        %v262 = vld [vmem:[#allocation3] sm:$0xff]
        %v263 = vmul.f32 %v253, %v262
        %264 = vadd.xlane.f32.xlu0 %v261
        %v265 = vpop.xlane.xlu0 %264
        %v266 = vadd.f32 %v263, %v265
        %267 = vst.msk [vmem:[#allocation3] sm:$0xff] %vm245, %v266
        %268 = vst.msk [vmem:[#allocation2] sm:$0xff] %vm245, %v250
        %p269 = scmp.eq.s32.totalorder %s33, 2
        // Predicated region
        $region37: #{tpu_custom_call.1} parent=27 // pred_check
          %p270 = pneg %p269
        $region38: #{tpu_custom_call.1} parent=27 // pred_check_branch
          %272 = sbr.rel (%p270) target = $region40
        $region39: #{tpu_custom_call.1} parent=27 // pred_region
          %v273 = vld [vmem:[#allocation2] sm:$0xff]
          %v274 = vld [vmem:[#allocation3] sm:$0xff]
          %v275 = vlog2.pop %v274
          %v276 = vmul.f32 %v275, 0.6931472
          %v277 = vadd.f32 %v273, %v276
          %v278 = vld [vmem:[#allocation4] sm:$0xff]
          %v279 = vsub.f32 %v277, %v278
          %v280 = vsel %vm226, %v279, 0.0
          %vm281 = vcmp.eq.s32.totalorder %v216, 0
          %283 = vset.pattern.permute.xlu0 0
          %284 = vperm.xlu0 %283, %v280
          %v285 = vpop.permute.xlu0 %284
          %v287 = vsel %vm281, %v285, 0.0
          %288 = vst [vmem:[%s198] sm:$0xff] %v287
        $region40: #{tpu_custom_call.1} parent=27 // pred_fallthru
          _
        %s289 = sand.u32 %s102, 1
        %s290 = scalar_lea.sflag [#allocation9], %s289
        %s291 = sand.u32 %s102, 1
        %s292 = smul.addr %s291, 8
        %s293 = scalar_lea.vmem [#allocation10], %s292
        // Predicated region
        $region41: #{tpu_custom_call.1} parent=27 // pred_check
          %p294 = pneg %p112
        $region42: #{tpu_custom_call.1} parent=27 // pred_check_branch
          %296 = sbr.rel (%p294) target = $region44
        $region43: #{tpu_custom_call.1} parent=27 // pred_region
          %298 = vsyncadd %s290, 0
          %s299 = smul.addr %s32, 8
          %s300 = scalar_lea.hbm %s3, %s299
          %s302 = sshll.u32 %s293, 4
          %s303 = int_to_ptr.vmem [resolvable:$true] %s302
          %s304 = sshll.u32 %s300, 4
          %s305 = int_to_ptr.hbm [resolvable:$true] %s304
          %307 = dma.vmem_to_hbm [thread:$0]  %s303, 128, %s305, %s290
        $region44: #{tpu_custom_call.1} parent=27 // pred_fallthru
          _
      $region28: #{tpu_custom_call.1} parent=5 // pred_fallthru
        _
      %p308 = scmp.le.s32.totalorder 2, %s23
      // Predicated region
      $region45: #{tpu_custom_call.1} parent=5 // pred_check
        %p309 = pneg %p308
      $region46: #{tpu_custom_call.1} parent=5 // pred_check_branch
        %311 = sbr.rel (%p309) target = $region48
      $region47: #{tpu_custom_call.1} parent=5 // pred_region
        %s312 = ssub.s32 %s23, 2
        // Predicated region
        $region49: #{tpu_custom_call.1} parent=47 // pred_check
          %p313 = pneg %p118
        $region50: #{tpu_custom_call.1} parent=47 // pred_check_branch
          %315 = sbr.rel (%p313) target = $region52
        $region51: #{tpu_custom_call.1} parent=47 // pred_region
          %s316 = sand.u32 %s103, 1
          %s317 = scalar_lea.sflag [#allocation9], %s316
          %s318 = sand.u32 %s103, 1
          %s319 = smul.addr %s318, 8
          %s320 = scalar_lea.vmem [#allocation10], %s319
          %322 = dma.done %s317, 128
        $region52: #{tpu_custom_call.1} parent=47 // pred_fallthru
          _
      $region48: #{tpu_custom_call.1} parent=5 // pred_fallthru
        _
    $region6: #{tpu_custom_call.1} parent=1 // loop_footer
      %s27 = sadd.s32 1, %s23
    $region7: #{tpu_custom_call.1} parent=1 // loop_footer_branch
      %22 = sbr.rel target = $region3
    $region8: #{tpu_custom_call.1} parent=1 // loop_exit
      _
    %323 = vsyncpa [#allocation8], 1
    %s324 = scalar_lea.sflag [#allocation8], 1
    %325 = vsyncpa %s324, 1
    %326 = vsyncpa [#allocation9], 1
    %s327 = scalar_lea.sflag [#allocation9], 1
    %328 = vsyncpa %s327, 1

</llo_original>
